<compile_context>
chip_gen: v6e
topology: v6e:2x2x1
jax: 0.10.0
libtpu: 0.0.40
codegen_flags: <defaults>
</compile_context>

<pallas_src>
import jax
import jax.numpy as jnp
from jax.experimental import pallas as pl
from jax.experimental.pallas import tpu as pltpu

LANES = 128


def _round_up(x, m):
    return ((x + m - 1) // m) * m


def fused_heads_kernel(x_ref, w_ref, b_ref, out_ref):
    """One fused linear for both heads.

    x:   [TB, D]      (bf16 or f32, VMEM)
    w:   [D,  Cpad]   (bf16 or f32, VMEM, columns = [taskA | taskB | zero pad])
    b:   [1,  Cpad]   (f32, VMEM)
    out: [TB, Cpad]   (f32, lane-dense 128-wide unmasked store)
    """
    acc = jnp.dot(x_ref[...], w_ref[...], preferred_element_type=jnp.float32)
    out_ref[...] = (acc + b_ref[...]).astype(out_ref.dtype)


def multitask_forward(sentence_embeddings, wA, bA, wB, bB,
                      *, compute_dtype=jnp.bfloat16, block_b=512):
    """Runs both classification heads in a single fused Pallas kernel.

    sentence_embeddings: [B, D] float32
    wA: [D, CA], bA: [CA]      (task A: sentence classification)
    wB: [D, CB], bB: [CB]      (task B: sentiment)
    Returns (logits_taskA [B, CA] f32, logits_taskB [B, CB] f32).
    """
    B, D = sentence_embeddings.shape
    CA = wA.shape[1]
    CB = wB.shape[1]
    C = CA + CB
    C_pad = _round_up(C, LANES)            # lane-dense output width

    # --- pack the two heads into one lane-dense weight / bias -----------------
    w_cat = jnp.concatenate([wA, wB], axis=1)                  # [D, C]
    w_cat = jnp.pad(w_cat, ((0, 0), (0, C_pad - C)))           # [D, C_pad]
    w_cat = w_cat.astype(compute_dtype)

    b_cat = jnp.concatenate([bA, bB]).reshape(1, C)            # [1, C]
    b_cat = jnp.pad(b_cat, ((0, 0), (0, C_pad - C)))           # [1, C_pad]
    b_cat = b_cat.astype(jnp.float32)                          # f32 epilogue

    x = sentence_embeddings.astype(compute_dtype)

    # --- batch tiling (8-sublane aligned); pad B if needed --------------------
    TB = min(block_b, _round_up(B, 8))
    TB = _round_up(TB, 8)
    B_pad = _round_up(B, TB)
    if B_pad != B:
        x = jnp.pad(x, ((0, B_pad - B), (0, 0)))
    grid = (B_pad // TB,)

    itemsize = jnp.dtype(compute_dtype).itemsize
    cost = pl.CostEstimate(
        flops=2 * B_pad * D * C_pad,
        transcendentals=0,
        bytes_accessed=(B_pad * D * itemsize          # x
                        + D * C_pad * itemsize        # W_cat
                        + C_pad * 4                   # bias
                        + B_pad * C_pad * 4),         # out
    )

    out = pl.pallas_call(
        fused_heads_kernel,
        out_shape=jax.ShapeDtypeStruct((B_pad, C_pad), jnp.float32),
        grid_spec=pltpu.PrefetchScalarGridSpec(
            num_scalar_prefetch=0,
            grid=grid,
            in_specs=[
                pl.BlockSpec((TB, D), lambda i: (i, 0)),        # x: blocked on B
                pl.BlockSpec((D, C_pad), lambda i: (0, 0)),     # W: VMEM-resident
                pl.BlockSpec((1, C_pad), lambda i: (0, 0)),     # b: VMEM-resident
            ],
            out_specs=pl.BlockSpec((TB, C_pad), lambda i: (i, 0)),
        ),
        compiler_params=pltpu.CompilerParams(
            dimension_semantics=("parallel",),
        ),
        cost_estimate=cost,
    )(x, w_cat, b_cat)

    # free layout plumbing in the wrapper (XLA fuses these slices)
    logits_a = out[:B, :CA]
    logits_b = out[:B, CA:C]
    return logits_a, logits_b


if __name__ == "__main__":
    # Shapes implied by the module: sentence embeddings [batch, embedding_dim],
    # taskA head -> 2 classes, taskB head -> 3 classes.
    batch = 8
    embedding_dim = 32
    num_classes_taskA = 2
    num_classes_taskB = 3

    key = jax.random.PRNGKey(0)
    k_x, k_wa, k_ba, k_wb, k_bb = jax.random.split(key, 5)

    # Deterministic synthetic parameters (PyTorch nn.Linear-like init scale).
    scale = 1.0 / jnp.sqrt(embedding_dim)
    x = jax.random.normal(k_x, (batch, embedding_dim), dtype=jnp.float32)
    wA = jax.random.uniform(k_wa, (embedding_dim, num_classes_taskA),
                            minval=-scale, maxval=scale, dtype=jnp.float32)
    bA = jax.random.uniform(k_ba, (num_classes_taskA,),
                            minval=-scale, maxval=scale, dtype=jnp.float32)
    wB = jax.random.uniform(k_wb, (embedding_dim, num_classes_taskB),
                            minval=-scale, maxval=scale, dtype=jnp.float32)
    bB = jax.random.uniform(k_bb, (embedding_dim * 0 + num_classes_taskB,),
                            minval=-scale, maxval=scale, dtype=jnp.float32)

    logits_a, logits_b = multitask_forward(x, wA, bA, wB, bB)
    jax.block_until_ready((logits_a, logits_b))

    assert logits_a.shape == (batch, num_classes_taskA)
    assert logits_b.shape == (batch, num_classes_taskB)

    # Tight check against a bf16-input / f32-accumulate reference (same math).
    x_bf = x.astype(jnp.bfloat16).astype(jnp.float32)
    wA_bf = wA.astype(jnp.bfloat16).astype(jnp.float32)
    wB_bf = wB.astype(jnp.bfloat16).astype(jnp.float32)
    ref_a_bf = x_bf @ wA_bf + bA
    ref_b_bf = x_bf @ wB_bf + bB
    assert jnp.allclose(logits_a, ref_a_bf, atol=1e-4, rtol=1e-4)
    assert jnp.allclose(logits_b, ref_b_bf, atol=1e-4, rtol=1e-4)

    # Loose sanity check vs. the exact f32 PyTorch-module semantics
    # (bf16 operand cast only; classifier-head precision loss is negligible).
    ref_a = x @ wA + bA
    ref_b = x @ wB + bB
    assert jnp.allclose(logits_a, ref_a, atol=5e-2, rtol=5e-2)
    assert jnp.allclose(logits_b, ref_b, atol=5e-2, rtol=5e-2)

    print("KERNEL_OK")
</pallas_src>

<mosaic_0001>
module attributes {stable_mosaic.version = 11 : i64} {
  func.func @fused_heads_kernel(%arg0: i32, %arg1: memref<8x32xbf16, #tpu.memory_space<vmem>>, %arg2: memref<32x128xbf16, #tpu.memory_space<vmem>>, %arg3: memref<1x128xf32, #tpu.memory_space<vmem>>, %arg4: memref<8x128xf32, #tpu.memory_space<vmem>>) attributes {dimension_semantics = [#tpu.dimension_semantics<parallel>], iteration_bounds = array<i64: 1>, scalar_prefetch = 0 : i64, scratch_operands = 0 : i64, tpu.core_type = #tpu.core_type<tc>, window_params = [{transform_indices = @transform_0, window_bounds = array<i64: 8, 32>}, {pipeline_mode = #tpu.pipeline_mode<synchronous>, transform_indices = @transform_1, window_bounds = array<i64: 32, 128>}, {pipeline_mode = #tpu.pipeline_mode<synchronous>, transform_indices = @transform_2, window_bounds = array<i64: 1, 128>}, {transform_indices = @transform_3, window_bounds = array<i64: 8, 128>}]} {
    %c0 = arith.constant 0 : index
    %c0_0 = arith.constant 0 : index
    %0 = vector.load %arg1[%c0, %c0_0] : memref<8x32xbf16, #tpu.memory_space<vmem>>, vector<8x32xbf16>
    %c0_1 = arith.constant 0 : index
    %c0_2 = arith.constant 0 : index
    %1 = vector.load %arg2[%c0_1, %c0_2] : memref<32x128xbf16, #tpu.memory_space<vmem>>, vector<32x128xbf16>
    %cst = arith.constant dense<0.000000e+00> : vector<8x128xf32>
    %2 = tpu.matmul %0, %1, %cst {dimension_numbers = #tpu.dot_dimension_numbers<[1], [0], [0], [1], [0, 0, 1, 1], [], []>} : vector<8x32xbf16>, vector<32x128xbf16>, vector<8x128xf32> -> vector<8x128xf32>
    %c0_3 = arith.constant 0 : index
    %c0_4 = arith.constant 0 : index
    %3 = vector.load %arg3[%c0_3, %c0_4] : memref<1x128xf32, #tpu.memory_space<vmem>>, vector<1x128xf32>
    %4 = vector.broadcast %3 : vector<1x128xf32> to vector<8x128xf32>
    %5 = arith.addf %2, %4 : vector<8x128xf32>
    %c0_5 = arith.constant 0 : index
    %c0_6 = arith.constant 0 : index
    %6 = vector.load %arg4[%c0_5, %c0_6] : memref<8x128xf32, #tpu.memory_space<vmem>>, vector<8x128xf32>
    tpu.vector_store %arg4[%c0_5, %c0_6], %5 {strides = array<i32>} : memref<8x128xf32, #tpu.memory_space<vmem>>, vector<8x128xf32>,
    return
  }
  func.func @transform_0(%arg0: i32) -> (i32, i32) {
    %c0_i32 = arith.constant 0 : i32
    %c0_i32_0 = arith.constant 0 : i32
    return %arg0, %c0_i32 : i32, i32
  }
  func.func @transform_1(%arg0: i32) -> (i32, i32) {
    %c0_i32 = arith.constant 0 : i32
    %c0_i32_0 = arith.constant 0 : i32
    %c0_i32_1 = arith.constant 0 : i32
    return %c0_i32, %c0_i32_0 : i32, i32
  }
  func.func @transform_2(%arg0: i32) -> (i32, i32) {
    %c0_i32 = arith.constant 0 : i32
    %c0_i32_0 = arith.constant 0 : i32
    %c0_i32_1 = arith.constant 0 : i32
    return %c0_i32, %c0_i32_0 : i32, i32
  }
  func.func @transform_3(%arg0: i32) -> (i32, i32) {
    %c0_i32 = arith.constant 0 : i32
    %c0_i32_0 = arith.constant 0 : i32
    return %arg0, %c0_i32 : i32, i32
  }
}

</mosaic_0001>

<llo_original>
// kernel: tpu_custom_call.1
$region0: #{tpu_custom_call.1}
  #allocation0 [shape = 'u32[]', space=smem, size = 0x4, offset = 0x4, fixed_abs, tag = 'smem constant byte address 0x4 - core index']
  #allocation1 [shape = 'u32[144,128]{1,0:T(1,128)}', space=vmem, size = 0x12000, scoped, tag = 'internal scratch']
  %s0 = inlined_call_operand.hbm [shape: bf16[8,32], index: 0, kind: input, shape index: {}]
  %s1 = inlined_call_operand.hbm [shape: bf16[32,128], index: 1, kind: input, shape index: {}]
  %s2 = inlined_call_operand.vmem [shape: f32[1,128], index: 2, kind: input, shape index: {}]
  %s3 = inlined_call_operand.hbm [shape: f32[8,128], index: 3, kind: output, shape index: {}]
  %s4 = sld [smem:[#allocation0]]
  $region30: #{tpu_custom_call.1} parent=0
    _
  %s6 = ssub.s32 1, %s4
  %s7 = scalar_select 0, %s6, %s4
  $region1: #{tpu_custom_call.1} parent=0
    #allocation2 [shape = 'u8[2048]{0}', space=vmem, size = 0x800, scoped, tag = 'input window, operand 0, single buffered']
    #allocation3 [shape = 's32[1]{0}', space=sflag, size = 0x4, scoped, tag = 'scoped memory for tpu_custom_call.1']
    #allocation4 [shape = 's32[1]{0}', space=sflag, size = 0x4, scoped, tag = 'scoped memory for tpu_custom_call.1']
    #allocation5 [shape = 'u8[8192]{0}', space=vmem, size = 0x2000, scoped, tag = 'input window, operand 1, single buffered']
    #allocation6 [shape = 's32[1]{0}', space=sflag, size = 0x4, scoped, tag = 'scoped memory for tpu_custom_call.1']
    #allocation7 [shape = 'u8[4096]{0}', space=vmem, size = 0x1000, scoped, tag = 'output window, operand 0, single buffered']
    %8 = vsyncpa [#allocation3], 0
    %9 = vsyncpa [#allocation6], 0
    %10 = vsyncpa [#allocation4], 0
    // Predicated region
    $region2: #{tpu_custom_call.1} parent=1 // pred_check
      _
    $region3: #{tpu_custom_call.1} parent=1 // pred_check_branch
      %12 = sbr.rel (0) target = $region5
    $region4: #{tpu_custom_call.1} parent=1 // pred_region
      %s14 = ssub.s32 64, 64
      %15 = vsyncadd [#allocation3], %s14
      %s17 = sshll.u32 [#allocation2], 4
      %s18 = int_to_ptr.vmem [resolvable:$true] %s17
      %20 = dma.hbm_to_vmem [thread:$0]  %s0, 64, %s18, [#allocation3]
    $region5: #{tpu_custom_call.1} parent=1 // pred_fallthru
      _
    // Predicated region
    $region6: #{tpu_custom_call.1} parent=1 // pred_check
      _
    $region7: #{tpu_custom_call.1} parent=1 // pred_check_branch
      %22 = sbr.rel (0) target = $region9
    $region8: #{tpu_custom_call.1} parent=1 // pred_region
      %s24 = ssub.s32 256, 256
      %25 = vsyncadd [#allocation6], %s24
      %s26 = sshll.u32 [#allocation5], 4
      %s27 = int_to_ptr.vmem [resolvable:$true] %s26
      %32 = dma.hbm_to_vmem [thread:$0]  %s1, 256, %s27, [#allocation6], 64, 64, 4
    $region9: #{tpu_custom_call.1} parent=1 // pred_fallthru
      _
    // Predicated region
    $region10: #{tpu_custom_call.1} parent=1 // pred_check
      _
    $region11: #{tpu_custom_call.1} parent=1 // pred_check_branch
      %34 = sbr.rel (0) target = $region13
    $region12: #{tpu_custom_call.1} parent=1 // pred_region
      _
    $region13: #{tpu_custom_call.1} parent=1 // pred_fallthru
      _
    // Predicated region
    $region14: #{tpu_custom_call.1} parent=1 // pred_check
      _
    $region15: #{tpu_custom_call.1} parent=1 // pred_check_branch
      %36 = sbr.rel (0) target = $region17
    $region16: #{tpu_custom_call.1} parent=1 // pred_region
      %37 = dma.done [#allocation3], 64
    $region17: #{tpu_custom_call.1} parent=1 // pred_fallthru
      _
    // Predicated region
    $region18: #{tpu_custom_call.1} parent=1 // pred_check
      _
    $region19: #{tpu_custom_call.1} parent=1 // pred_check_branch
      %39 = sbr.rel (0) target = $region21
    $region20: #{tpu_custom_call.1} parent=1 // pred_region
      %40 = dma.done [#allocation6], 256
    $region21: #{tpu_custom_call.1} parent=1 // pred_fallthru
      _
    %v42 = vld [vmem:[#allocation2] sm:$0xf]
    %v43 = vld [vmem:[#allocation5] sm:$0xf]
    %v44 = vld [vmem:[#allocation5 + $0x4] sm:$0xf]
    %v45 = vld [vmem:[#allocation5 + $0x8] sm:$0xf]
    %v46 = vld [vmem:[#allocation5 + $0xc] sm:$0xf]
    %v47 = vld [vmem:[%s2] sm:$0x1]
    %v49 = vlaneseq
    %v50 = vshrl.u32 %v49, 7
    %v51 = vsub.s32 0, %v50
    %v52 = vrot.slane %v47, %v51
    %v58 = vunpack.c.l.b16 %v43
    %v59 = vunpack.c.l.b16 %v44
    %v60 = vunpack.c.l.b16 %v45
    %v61 = vunpack.c.l.b16 %v46
    %v62 = vpack.c.b16 %v59, %v58
    %v63 = vpack.c.b16 %v61, %v60
    %vm66 = vcmask 261120
    %v68 = vsel %vm66, %v42, 0
    %70 = vmatprep.subr.bf16.mxu0 0
    %71 = vmatpush1.bf16.msra.mxu0 0
    %72 = vmatprep.subr.bf16.mxu0 0
    %73 = vmatpush1.bf16.msra.mxu0 0
    %74 = vmatprep.subr.bf16.mxu0 0
    %75 = vmatpush1.bf16.msra.mxu0 0
    %76 = vmatprep.subr.bf16.mxu0 0
    %77 = vmatpush1.bf16.msra.mxu0 0
    %78 = vmatprep.subr.bf16.mxu0 0
    %79 = vmatpush1.bf16.msra.mxu0 0
    %80 = vmatprep.subr.bf16.mxu0 0
    %81 = vmatpush1.bf16.msra.mxu0 0
    %82 = vmatprep.subr.bf16.mxu0 0
    %83 = vmatpush1.bf16.msra.mxu0 %v63
    %84 = vmatprep.subr.bf16.mxu0 0
    %85 = vmatpush1.bf16.msra.mxu0 %v62
    %86 = vmatprep.subr.bf16.mxu0 0
    %87 = vmatpush2.bf16.msra.mxu0 0
    %88 = vmatprep.subr.bf16.mxu0 0
    %89 = vmatpush2.bf16.msra.mxu0 0
    %90 = vmatprep.subr.bf16.mxu0 0
    %91 = vmatpush2.bf16.msra.mxu0 0
    %92 = vmatprep.subr.bf16.mxu0 0
    %93 = vmatpush2.bf16.msra.mxu0 0
    %94 = vmatprep.subr.bf16.mxu0 0
    %95 = vmatpush2.bf16.msra.mxu0 0
    %96 = vmatprep.subr.bf16.mxu0 0
    %97 = vmatpush2.bf16.msra.mxu0 0
    %98 = vmatprep.subr.bf16.mxu0 0
    %99 = vmatpush2.bf16.msra.mxu0 0
    %100 = vmatprep.subr.bf16.mxu0 0
    %101 = vmatpush2.bf16.msra.mxu0 0
    %102 = vmatprep.mubr.bf16.mxu0 0
    %103 = vmatmul.mubr.bf16.gmra.mxu0 %v68
    %v104 = vpop.f32.mrf.mxu0
    %v105 = vadd.f32 %v52, %v104
    %v106 = vpop.f32.mrf.mxu0
    %v107 = vpop.f32.mrf.mxu0
    %v108 = vpop.f32.mrf.mxu0
    %109 = vdwg.mxu0
    %110 = vst [vmem:[#allocation7] sm:$0xff] %v105
    // Predicated region
    $region22: #{tpu_custom_call.1} parent=1 // pred_check
      _
    $region23: #{tpu_custom_call.1} parent=1 // pred_check_branch
      %112 = sbr.rel (0) target = $region25
    $region24: #{tpu_custom_call.1} parent=1 // pred_region
      %s114 = ssub.s32 128, 128
      %115 = vsyncadd [#allocation4], %s114
      %s117 = sshll.u32 [#allocation7], 4
      %s118 = int_to_ptr.vmem [resolvable:$true] %s117
      %120 = dma.vmem_to_hbm [thread:$0]  %s118, 128, %s3, [#allocation4]
    $region25: #{tpu_custom_call.1} parent=1 // pred_fallthru
      _
    // Predicated region
    $region26: #{tpu_custom_call.1} parent=1 // pred_check
      _
    $region27: #{tpu_custom_call.1} parent=1 // pred_check_branch
      %122 = sbr.rel (0) target = $region29
    $region28: #{tpu_custom_call.1} parent=1 // pred_region
      %123 = dma.done [#allocation4], 128
    $region29: #{tpu_custom_call.1} parent=1 // pred_fallthru
      _
    %124 = vsyncpa [#allocation3], 1
    %125 = vsyncpa [#allocation6], 1
    %126 = vsyncpa [#allocation4], 1

</llo_original>
